<compile_context>
chip_gen: v7x
topology: tpu7x:2x2x1
jax: 0.10.0
libtpu: 0.0.40
codegen_flags: <defaults>
</compile_context>

<pallas_src>
import functools

import numpy as np
import jax
import jax.numpy as jnp
from jax import lax
from jax.experimental import pallas as pl
from jax.experimental.pallas import tpu as pltpu


_VMEM = pl.BlockSpec(memory_space=pltpu.MemorySpace.VMEM)
_HIGHEST = lax.Precision.HIGHEST      # reference (ground truth) only

CP = 16        # channel rows, padded to a multiple of 8 (max real channels = 13)
S = 32         # per-sample square canvas side
SS = S * S     # 1024 canvas lanes per sample (8 lane-tiles)
MARGIN = 2     # zero margin supplying the convolutions' zero padding
NCLASS = 10


# ----------------------------------------------------------------------------
# pltpu.roll direction probe (resolved once, host side, outside any trace)
# ----------------------------------------------------------------------------

@functools.lru_cache(maxsize=None)
def _roll_shift_sign():
    """+1 if pltpu.roll follows jnp.roll (out[i] = in[i - shift]), -1 if
    reversed.  Only static lane rotations are needed, so the sign is folded in
    at trace time.  The probe uses the same default compile settings as the
    main kernel."""
    def k(x_ref, o_ref):
        o_ref[...] = pltpu.roll(x_ref[...], shift=1, axis=1)

    x = jnp.arange(128, dtype=jnp.float32).reshape(1, 128)
    y = np.asarray(pl.pallas_call(
        k, out_shape=jax.ShapeDtypeStruct((1, 128), jnp.float32),
        in_specs=[_VMEM], out_specs=_VMEM)(x))
    if y[0, 0] == 127.0 and y[0, 1] == 0.0:
        return 1
    if y[0, 0] == 1.0 and y[0, 127] == 0.0:
        return -1
    raise RuntimeError(f"unexpected pltpu.roll semantics: {y[0, :4]}")


# ----------------------------------------------------------------------------
# Fused whole-network kernel (runs on one sample's (CP, S*S) canvas)
# ----------------------------------------------------------------------------

def _make_net_kernel(layers1, layers2, n_masks, Hf, roll_sign):
    n_layers = len(layers1) + len(layers2)
    inv_area = 1.0 / float(Hf * Hf)

    def rd(a, dy, dx, stride):
        # value at canvas lane l of the result == a[l + stride*(dy*S + dx)]
        s = stride * (dy * S + dx)
        if s == 0:
            return a
        return pltpu.roll(a, shift=(-roll_sign * s) % SS, axis=1)

    def conv_layer(a, lyr, w, b, mask, stride):
        K, d, p = lyr['K'], lyr['dil'], lyr['pad']
        if K == 1:
            stack = a                                      # (CP, SS)
        else:
            # im2col on the sublane axis: K*K tile-aligned rolled copies.
            stack = jnp.concatenate(
                [rd(a, ky * d - p, kx * d - p, stride)
                 for ky in range(K) for kx in range(K)], axis=0)   # (CP*K*K, SS)
        # Single deep-contraction MXU dot (DEFAULT precision, f32 accumulate).
        y = jnp.dot(w, stack, preferred_element_type=jnp.float32)  # (CP, SS)
        y = y + b                                          # folded BN shift
        if lyr['relu']:
            y = jnp.maximum(y, 0.0)
        # zero everything outside the valid (lattice) region -> the next
        # layer's margin reads implement conv zero padding exactly.
        return y * mask

    def kernel(*refs):
        assert len(refs) == n_masks + 2 * n_layers + 3
        idx = 0
        x_ref = refs[idx]; idx += 1
        mask_refs = refs[idx:idx + n_masks]; idx += n_masks
        cls_ref = refs[idx]; idx += 1
        wb = []
        for _ in range(n_layers):
            wb.append((refs[idx], refs[idx + 1])); idx += 2
        o_ref = refs[idx]

        masks = [m[...] for m in mask_refs]     # hoisted: one load per mask
        a = x_ref[0]                            # (CP, SS) this sample's canvas

        li = 0
        for lyr in layers1:                     # convblock1 (stride-1 lattice)
            w_ref, b_ref = wb[li]; li += 1
            a = conv_layer(a, lyr, w_ref[...], b_ref[...],
                           masks[lyr['mask_i']], stride=1)

        # Fused MaxPool2d(2, 2): 2x2 max rooted at every lane; block 2 then
        # addresses the stride-2 lattice of the same canvas directly, so no
        # lane compaction is needed.
        a = jnp.maximum(jnp.maximum(a, rd(a, 0, 1, 1)),
                        jnp.maximum(rd(a, 1, 0, 1), rd(a, 1, 1, 1)))

        for lyr in layers2:                     # convblock2 (stride-2 lattice)
            w_ref, b_ref = wb[li]; li += 1
            a = conv_layer(a, lyr, w_ref[...], b_ref[...],
                           masks[lyr['mask_i']], stride=2)

        # AdaptiveAvgPool2d(1): `a` is masked to the final Hf x Hf lattice
        # region, so the spatial mean is a lane-sum over the canvas / Hf^2.
        pooled = jnp.sum(a, axis=1, keepdims=True) * inv_area      # (CP, 1)
        logits = pooled + cls_ref[...]          # -1e30 on padded channel rows
        mx = jnp.max(logits, axis=0, keepdims=True)
        z = logits - mx
        lse = jnp.log(jnp.sum(jnp.exp(z), axis=0, keepdims=True))
        logp = z - lse                                              # (CP, 1)
        o_ref[0] = jnp.broadcast_to(logp, (CP, 128))   # lane-dense head store

    return kernel


# ----------------------------------------------------------------------------
# Host-side prep: packed (stacked-tap) weights, lattice masks, geometry checks
# ----------------------------------------------------------------------------

def _make_mask(h, stride):
    m = np.zeros((S, S), np.float32)
    m[MARGIN:MARGIN + stride * h:stride, MARGIN:MARGIN + stride * h:stride] = 1.0
    return jnp.asarray(m.reshape(1, SS))


def _prep_block(params, H_in, stride):
    """Returns (weight/bias arrays, layer descs, mask sizes, H_out).

    Per layer the packed weight is (CP, CP*K*K): W[co, r*CP + ci] so that a
    single jnp.dot against the sublane-stacked K*K rolled copies of the canvas
    computes the whole conv.  Depthwise-separable convs are folded:
    W[co, r*CP + ci] = wp[ci, co] * wd[r, ci].  BN scale is already folded
    into wp / w by init_params; the BN shift is the bias."""
    weights, descs, mask_sizes = [], [], []
    H = H_in
    for p in params:
        K, d, pad, Ci, Co = p['K'], p['dil'], p['pad'], p['Ci'], p['Co']
        Ho = H + 2 * pad - d * (K - 1)
        # every tap read must stay inside the per-sample canvas
        assert MARGIN - stride * pad >= 0, (MARGIN, stride, pad)
        assert MARGIN + stride * ((Ho - 1) + d * (K - 1) - pad) <= S - 1, \
            (H, Ho, K, d, pad, stride)
        if Ho not in mask_sizes:
            mask_sizes.append(Ho)
        W = np.zeros((CP, CP * K * K), np.float32)
        b = np.zeros((CP, 1), np.float32)
        if p['kind'] == 'dsc':
            wd = np.asarray(p['wd'], np.float32)            # (K*K, Ci)
            wp = np.asarray(p['wp'], np.float32)            # (Ci, Co)
            for r in range(K * K):
                W[:Co, r * CP:r * CP + Ci] = (wp * wd[r][:, None]).T
        else:
            w = np.asarray(p['w'], np.float32)              # (K*K*Ci, Co)
            for r in range(K * K):
                W[:Co, r * CP:r * CP + Ci] = w[r * Ci:(r + 1) * Ci, :].T
        b[:Co, 0] = np.asarray(p['bias'], np.float32).reshape(-1)
        weights += [jnp.asarray(W), jnp.asarray(b)]
        descs.append(dict(K=K, dil=d, pad=pad, relu=p['relu'],
                          mask_i=mask_sizes.index(Ho)))
        H = Ho
    return weights, descs, mask_sizes, H


# ----------------------------------------------------------------------------
# Forward pass: ONE fused pallas_call, batch grid axis (parallel on v7x)
# ----------------------------------------------------------------------------

def pallas_forward(x_nchw, params1, params2):
    N, Ci0, H0, W0 = x_nchw.shape
    assert Ci0 == 1 and H0 == W0 == 28, (N, Ci0, H0, W0)
    roll_sign = _roll_shift_sign()

    w1, d1, sizes1, Hb1 = _prep_block(params1, H0, stride=1)
    assert Hb1 % 2 == 0, Hb1
    w2, d2, sizes2, Hf = _prep_block(params2, Hb1 // 2, stride=2)
    for lyr in d2:
        lyr['mask_i'] += len(sizes1)
    masks = ([_make_mask(h, 1) for h in sizes1]
             + [_make_mask(h, 2) for h in sizes2])

    # additive class-validity mask for the head (padded channel rows -> -inf)
    cls = np.zeros((CP, 1), np.float32)
    cls[NCLASS:, 0] = -1e30
    cls = jnp.asarray(cls)

    # NCHW -> per-sample (CP, S*S) canvas; the zero margin supplies the
    # convolutions' zero padding (input layout plumbing, a couple of XLA ops).
    xp = jnp.pad(x_nchw[:, 0].astype(jnp.float32),
                 ((0, 0), (MARGIN, S - MARGIN - H0), (MARGIN, S - MARGIN - W0)))
    canvas = jnp.zeros((N, CP, SS), jnp.float32).at[:, 0, :].set(
        xp.reshape(N, SS))

    weights = w1 + w2
    kern = _make_net_kernel(d1, d2, len(masks), Hf, roll_sign)

    def full(arr):
        return pl.BlockSpec(arr.shape, lambda i: (0,) * arr.ndim)

    in_specs = ([pl.BlockSpec((1, CP, SS), lambda i: (i, 0, 0))]
                + [full(m) for m in masks]
                + [full(cls)]
                + [full(w) for w in weights])

    out = pl.pallas_call(
        kern,
        grid=(N,),
        out_shape=jax.ShapeDtypeStruct((N, CP, 128), jnp.float32),
        in_specs=in_specs,
        out_specs=pl.BlockSpec((1, CP, 128), lambda i: (i, 0, 0)),
        compiler_params=pltpu.CompilerParams(
            # v7x: one sample per TensorCore; v5e/v6e: cheap 2-step loop.
            dimension_semantics=("parallel",)),
    )(canvas, *masks, cls, *weights)

    return out[:, :NCLASS, 0]                 # (N, 10) log-probabilities


# ----------------------------------------------------------------------------
# Layer configuration (mirrors Net.__init__; Dropout = identity in eval)
# ----------------------------------------------------------------------------

LAYER_CFG_BLOCK1 = [
    dict(kind='dsc',  Ci=1,  Co=10, K=3, pad=1, dil=1, bn=True,  relu=True),
    dict(kind='conv', Ci=10, Co=10, K=3, pad=1, dil=2, bn=True,  relu=True),
    dict(kind='dsc',  Ci=10, Co=10, K=3, pad=1, dil=1, bn=True,  relu=True),
    dict(kind='conv', Ci=10, Co=10, K=3, pad=1, dil=2, bn=True,  relu=True),
    # Dropout(0.05) -> identity
    dict(kind='dsc',  Ci=10, Co=10, K=3, pad=1, dil=1, bn=True,  relu=True),
    dict(kind='conv', Ci=10, Co=10, K=3, pad=1, dil=2, bn=True,  relu=True),
    dict(kind='dsc',  Ci=10, Co=13, K=3, pad=1, dil=1, bn=True,  relu=True),
]
LAYER_CFG_BLOCK2 = [
    dict(kind='dsc',  Ci=13, Co=10, K=1, pad=0, dil=1, bn=True,  relu=True),
    dict(kind='conv', Ci=10, Co=10, K=3, pad=1, dil=2, bn=True,  relu=True),
    dict(kind='dsc',  Ci=10, Co=10, K=3, pad=1, dil=1, bn=True,  relu=True),
    dict(kind='conv', Ci=10, Co=10, K=3, pad=1, dil=2, bn=True,  relu=True),
    # Dropout(0.05) -> identity
    dict(kind='dsc',  Ci=10, Co=13, K=3, pad=1, dil=1, bn=True,  relu=True),
    dict(kind='conv', Ci=13, Co=13, K=3, pad=1, dil=3, bn=True,  relu=True),
    dict(kind='dsc',  Ci=13, Co=13, K=3, pad=0, dil=1, bn=True,  relu=True),
    dict(kind='dsc',  Ci=13, Co=10, K=1, pad=0, dil=1, bn=False, relu=False),
]


def init_params(key, cfgs):
    params = []
    for cfg in cfgs:
        key, k1, k2, k3, k4, k5, k6 = jax.random.split(key, 7)
        Ci, Co, K = cfg['Ci'], cfg['Co'], cfg['K']
        if cfg['bn']:
            gamma = 1.0 + 0.1 * jax.random.normal(k3, (Co,))
            beta = 0.1 * jax.random.normal(k4, (Co,))
            rmean = 0.05 * jax.random.normal(k5, (Co,))
            rvar = 1.0 + 0.1 * jax.random.uniform(k6, (Co,))
            scale = gamma / jnp.sqrt(rvar + 1e-5)
            shift = beta - rmean * scale
        else:
            scale = jnp.ones((Co,), jnp.float32)
            shift = jnp.zeros((Co,), jnp.float32)
        bias = shift.reshape(1, 1, 1, Co).astype(jnp.float32)
        if cfg['kind'] == 'dsc':
            wd = jax.random.normal(k1, (K * K, Ci)) * (1.0 / K)
            wp = jax.random.normal(k2, (Ci, Co)) * (1.0 / np.sqrt(Ci))
            wp = wp * scale[None, :]
            params.append(dict(cfg, wd=wd.astype(jnp.float32),
                               wp=wp.astype(jnp.float32), bias=bias))
        else:
            w = jax.random.normal(k1, (K * K * Ci, Co)) * (1.0 / np.sqrt(K * K * Ci))
            w = w * scale[None, :]
            params.append(dict(cfg, w=w.astype(jnp.float32), bias=bias))
    return key, params


# ----------------------------------------------------------------------------
# Pure-JAX reference (f32, HIGHEST precision) for correctness checking
# ----------------------------------------------------------------------------

def _ref_layer(h, p):
    K, pad, dil, Ci = p['K'], p['pad'], p['dil'], p['Ci']
    if p['kind'] == 'dsc':
        wd = p['wd'].reshape(K, K, 1, Ci)                 # HWIO, groups = Ci
        dw = lax.conv_general_dilated(
            h, wd, (1, 1), ((pad, pad), (pad, pad)),
            dimension_numbers=('NHWC', 'HWIO', 'NHWC'),
            feature_group_count=Ci, precision=_HIGHEST)
        y = jnp.einsum('nhwc,cd->nhwd', dw, p['wp'], precision=_HIGHEST)
    else:
        Co = p['Co']
        w = p['w'].reshape(K, K, Ci, Co)                  # HWIO
        y = lax.conv_general_dilated(
            h, w, (1, 1), ((pad, pad), (pad, pad)), rhs_dilation=(dil, dil),
            dimension_numbers=('NHWC', 'HWIO', 'NHWC'), precision=_HIGHEST)
    y = y + p['bias']
    if p['relu']:
        y = jnp.maximum(y, 0.0)
    return y


def reference_forward(x_nhwc, params1, params2):
    h = x_nhwc
    for p in params1:
        h = _ref_layer(h, p)
    N, H, W, C = h.shape
    h = h.reshape(N, H // 2, 2, W // 2, 2, C).max(axis=(2, 4))
    for p in params2:
        h = _ref_layer(h, p)
    pooled = h.mean(axis=(1, 2))
    return jax.nn.log_softmax(pooled, axis=-1)


# ----------------------------------------------------------------------------

if __name__ == "__main__":
    key = jax.random.PRNGKey(0)
    key, kx = jax.random.split(key)
    # Input matching the PyTorch module (MNIST-like): NCHW (2, 1, 28, 28).
    x_nchw = jax.random.normal(kx, (2, 1, 28, 28), dtype=jnp.float32)
    key, params1 = init_params(key, LAYER_CFG_BLOCK1)
    key, params2 = init_params(key, LAYER_CFG_BLOCK2)

    _roll_shift_sign()   # resolve the pltpu.roll convention outside any trace

    fwd = jax.jit(lambda x: pallas_forward(x, params1, params2))
    out = jax.block_until_ready(fwd(x_nchw))

    x_nhwc = jnp.transpose(x_nchw, (0, 2, 3, 1))
    ref = jax.block_until_ready(reference_forward(x_nhwc, params1, params2))

    assert out.shape == (2, 10), out.shape
    # The kernel uses DEFAULT (single-pass bf16) MXU precision per the perf
    # review; accumulated rounding over ~16 stacked-tap matmuls vs the f32
    # HIGHEST-precision reference is typically O(1e-2) on these log-probs, so
    # the bound below has margin while still catching any structural bug
    # (wrong tap / mask / pooling), which would be O(1).
    np.testing.assert_allclose(np.asarray(out), np.asarray(ref),
                               rtol=1e-1, atol=1e-1)
    # log_softmax rows must exp-sum to 1
    np.testing.assert_allclose(np.exp(np.asarray(out)).sum(-1), np.ones(2),
                               rtol=1e-3)

    print("KERNEL_OK")
</pallas_src>

<mosaic_0001>
module attributes {stable_mosaic.version = 11 : i64} {
  func.func @k(%arg0: memref<1x128xf32, #tpu.memory_space<vmem>>, %arg1: memref<1x128xf32, #tpu.memory_space<vmem>>) attributes {dimension_semantics = [], scalar_prefetch = 0 : i64, scratch_operands = 0 : i64, tpu.core_type = #tpu.core_type<tc>} {
    %c0 = arith.constant 0 : index
    %c0_0 = arith.constant 0 : index
    %0 = vector.load %arg0[%c0, %c0_0] : memref<1x128xf32, #tpu.memory_space<vmem>>, vector<1x128xf32>
    %c1_i32 = arith.constant 1 : i32
    %1 = tpu.dynamic_rotate %0 by %c1_i32 dim 1 : vector<1x128xf32>, i32 -> vector<1x128xf32>
    %c0_1 = arith.constant 0 : index
    %c0_2 = arith.constant 0 : index
    %2 = vector.load %arg1[%c0_1, %c0_2] : memref<1x128xf32, #tpu.memory_space<vmem>>, vector<1x128xf32>
    tpu.vector_store %arg1[%c0_1, %c0_2], %1 {strides = array<i32>} : memref<1x128xf32, #tpu.memory_space<vmem>>, vector<1x128xf32>,
    return
  }
}

</mosaic_0001>

<llo_original>
// kernel: tpu_custom_call.1
$region0: #{tpu_custom_call.1}
  #allocation0 [shape = 'u32[]', space=smem, size = 0x4, offset = 0x4, fixed_abs, tag = 'smem constant byte address 0x4 - core index']
  #allocation1 [shape = 'u32[144,128]{1,0:T(1,128)}', space=vmem, size = 0x12000, scoped, tag = 'internal scratch']
  %s0 = inlined_call_operand.hbm [shape: f32[1,128], index: 0, kind: input, shape index: {}]
  %s1 = inlined_call_operand.hbm [shape: f32[1,128], index: 1, kind: output, shape index: {}]
  %s2 = sld [smem:[#allocation0]]
  $region18: #{tpu_custom_call.1} parent=0
    _
  %s4 = ssub.s32 1, %s2
  %s5 = scalar_select 0, %s4, %s2
  $region1: #{tpu_custom_call.1} parent=0
    #allocation2 [shape = 'u8[512]{0}', space=vmem, size = 0x400, scoped, tag = 'input window, operand 0, single buffered']
    #allocation3 [shape = 's32[1]{0}', space=sflag, size = 0x4, scoped, tag = 'scoped memory for tpu_custom_call.1']
    #allocation4 [shape = 's32[1]{0}', space=sflag, size = 0x4, scoped, tag = 'scoped memory for tpu_custom_call.1']
    #allocation5 [shape = 'u8[512]{0}', space=vmem, size = 0x400, scoped, tag = 'output window, operand 0, single buffered']
    %6 = vsyncpa [#allocation3], 0
    %7 = vsyncpa [#allocation4], 0
    // Predicated region
    $region2: #{tpu_custom_call.1} parent=1 // pred_check
      _
    $region3: #{tpu_custom_call.1} parent=1 // pred_check_branch
      %9 = sbr.rel (0) target = $region5
    $region4: #{tpu_custom_call.1} parent=1 // pred_region
      %s11 = ssub.s32 16, 16
      %12 = vsyncadd [#allocation3], %s11
      %s14 = sshll.u32 [#allocation2], 4
      %s15 = int_to_ptr.vmem [resolvable:$true] %s14
      %17 = dma.hbm_to_vmem [thread:$0]  %s0, 16, %s15, [#allocation3]
    $region5: #{tpu_custom_call.1} parent=1 // pred_fallthru
      _
    // Predicated region
    $region6: #{tpu_custom_call.1} parent=1 // pred_check
      _
    $region7: #{tpu_custom_call.1} parent=1 // pred_check_branch
      %19 = sbr.rel (0) target = $region9
    $region8: #{tpu_custom_call.1} parent=1 // pred_region
      %20 = dma.done [#allocation3], 16
    $region9: #{tpu_custom_call.1} parent=1 // pred_fallthru
      _
    %v21 = vld [vmem:[#allocation2] sm:$0x1]
    %22 = vrot.lane.b32.xlu0 %v21, 1
    %v23 = vpop.permute.xlu0 %22
    %24 = vst [vmem:[#allocation5] sm:$0x1] %v23
    // Predicated region
    $region10: #{tpu_custom_call.1} parent=1 // pred_check
      _
    $region11: #{tpu_custom_call.1} parent=1 // pred_check_branch
      %26 = sbr.rel (0) target = $region13
    $region12: #{tpu_custom_call.1} parent=1 // pred_region
      %s28 = ssub.s32 16, 16
      %29 = vsyncadd [#allocation4], %s28
      %s31 = sshll.u32 [#allocation5], 4
      %s32 = int_to_ptr.vmem [resolvable:$true] %s31
      %34 = dma.vmem_to_hbm [thread:$0]  %s32, 16, %s1, [#allocation4]
    $region13: #{tpu_custom_call.1} parent=1 // pred_fallthru
      _
    // Predicated region
    $region14: #{tpu_custom_call.1} parent=1 // pred_check
      _
    $region15: #{tpu_custom_call.1} parent=1 // pred_check_branch
      %36 = sbr.rel (0) target = $region17
    $region16: #{tpu_custom_call.1} parent=1 // pred_region
      %37 = dma.done [#allocation4], 16
    $region17: #{tpu_custom_call.1} parent=1 // pred_fallthru
      _
    %38 = vsyncpa [#allocation3], 1
    %39 = vsyncpa [#allocation4], 1

</llo_original>
